<compile_context>
chip_gen: v7x
topology: tpu7x:2x2x1
jax: 0.10.0
libtpu: 0.0.40
codegen_flags: <defaults>
</compile_context>

<pallas_src>
import functools

import jax
import jax.numpy as jnp
from jax.experimental import pallas as pl
from jax.experimental.pallas import tpu as pltpu

CP = 128                 # padded channel width: one full 128-lane tile
FUSE_MAX_NPAD = 2048     # A_hat (bf16) <= 8 MiB -> fuse both layers in VMEM
TILE_M = 512             # A_hat row tile for the tiled (large-N) path
TILE_K = 1024            # A_hat reduction tile for the tiled path


def _round_up(x, m):
    return ((x + m - 1) // m) * m


def _plan(n):
    """(n_pad, fused?) for a graph with n nodes."""
    n_pad = _round_up(n, 128)
    if n_pad <= FUSE_MAX_NPAD:
        return n_pad, True
    # tiled path: n_pad multiple of 1024 so it divides TILE_M and TILE_K and
    # the parallel row-tile count (n_pad/512) is even for megacore balance.
    return _round_up(n, 1024), False


# ---------------------------------------------------------------------------
# Fused kernel: both GCN layers against A_hat resident in VMEM (A read once).
# Padded columns of A are exactly zero, so the relu(b1)-valued padded rows of
# h never contaminate real rows (invariant maintained by construction).
# ---------------------------------------------------------------------------
def _fused_gcn_kernel(a_ref, xw1_ref, w2_ref, b1_ref, b2_ref, z_ref):
    h = jnp.dot(a_ref[...], xw1_ref[...],
                preferred_element_type=jnp.float32) + b1_ref[...]
    h = jnp.maximum(h, 0.0).astype(jnp.bfloat16)                 # layer-1 act
    hw2 = jnp.dot(h, w2_ref[...],
                  preferred_element_type=jnp.float32).astype(jnp.bfloat16)
    z_ref[...] = (jnp.dot(a_ref[...], hw2,
                          preferred_element_type=jnp.float32) + b2_ref[...])


def fused_gcn(a_pad, xw1, w2_pad, b1_pad, b2_pad):
    n_pad = a_pad.shape[0]
    flops = 2 * (2 * n_pad * n_pad * CP) + 2 * n_pad * CP * CP
    bytes_accessed = (n_pad * n_pad * 2      # A_hat bf16, read once
                      + n_pad * CP * 2       # xw1 in (bf16)
                      + n_pad * CP * 4       # z out (f32)
                      + CP * CP * 2 + 2 * CP * 4)
    vmem = pl.BlockSpec(memory_space=pltpu.MemorySpace.VMEM)
    return pl.pallas_call(
        _fused_gcn_kernel,
        out_shape=jax.ShapeDtypeStruct((n_pad, CP), jnp.float32),
        in_specs=[vmem, vmem, vmem, vmem, vmem],
        out_specs=vmem,
        compiler_params=pltpu.CompilerParams(
            vmem_limit_bytes=32 * 1024 * 1024),
        cost_estimate=pl.CostEstimate(flops=flops, transcendentals=0,
                                      bytes_accessed=bytes_accessed),
    )(a_pad, xw1, w2_pad, b1_pad, b2_pad)


# ---------------------------------------------------------------------------
# Tiled kernel (large N): out = [relu](A_hat @ F + b)
#   grid = (row tiles, K tiles); rows "parallel" (megacore), K "arbitrary"
#   F is resident in VMEM (constant index_map) and sliced per K step.
# ---------------------------------------------------------------------------
def _agg_kernel(a_ref, f_ref, b_ref, o_ref, acc_ref, *, apply_relu, tk):
    k = pl.program_id(1)

    @pl.when(k == 0)
    def _():
        acc_ref[...] = jnp.zeros_like(acc_ref)

    start = pl.multiple_of(k * tk, tk)      # aligned slice of the resident F
    acc_ref[...] += jnp.dot(a_ref[...], f_ref[pl.ds(start, tk), :],
                            preferred_element_type=jnp.float32)

    @pl.when(k == pl.num_programs(1) - 1)
    def _():
        out = acc_ref[...] + b_ref[...]
        if apply_relu:
            out = jnp.maximum(out, 0.0)
        o_ref[...] = out.astype(o_ref.dtype)


def aggregate(a_pad, feats, bias, *, apply_relu, out_dtype):
    """out = [relu](a_pad @ feats + bias); a_pad [n_pad,n_pad] bf16,
    feats [n_pad,CP] bf16 (kept VMEM-resident), bias [1,CP] f32."""
    n_pad = a_pad.shape[0]
    tm, tk = TILE_M, TILE_K
    grid = (n_pad // tm, n_pad // tk)
    out_bytes = jnp.dtype(out_dtype).itemsize
    flops = 2 * n_pad * n_pad * CP
    bytes_accessed = (n_pad * n_pad * 2          # A_hat bf16, read once
                      + n_pad * CP * 2           # F (resident, single read)
                      + n_pad * CP * out_bytes   # output
                      + CP * 4)                  # bias
    kernel = functools.partial(_agg_kernel, apply_relu=apply_relu, tk=tk)
    return pl.pallas_call(
        kernel,
        out_shape=jax.ShapeDtypeStruct((n_pad, CP), out_dtype),
        grid=grid,
        in_specs=[
            pl.BlockSpec((tm, tk), lambda i, k: (i, k)),     # A row/col tile
            pl.BlockSpec((n_pad, CP), lambda i, k: (0, 0)),  # F resident
            pl.BlockSpec((1, CP), lambda i, k: (0, 0)),      # bias resident
        ],
        out_specs=pl.BlockSpec((tm, CP), lambda i, k: (i, 0)),
        scratch_shapes=[pltpu.VMEM((tm, CP), jnp.float32)],
        compiler_params=pltpu.CompilerParams(
            dimension_semantics=("parallel", "arbitrary"),
            vmem_limit_bytes=32 * 1024 * 1024),
        cost_estimate=pl.CostEstimate(flops=flops, transcendentals=0,
                                      bytes_accessed=bytes_accessed),
    )(a_pad, feats, bias)


# ---------------------------------------------------------------------------
# Forward pass
# ---------------------------------------------------------------------------
@jax.jit
def gcn_forward(a_pad, x, w1, b1, w2, b2, pool):
    """h = relu(A@(XW1)+b1); z = A@(hW2)+b2; out = P@z (eval: dropout = id).

    a_pad: pre-padded (n_pad, n_pad) bf16 normalized adjacency built once per
    graph (GCNConv cached=True semantics) -- no per-call pad/cast over A.
    """
    n = x.shape[0]
    n_pad = a_pad.shape[0]
    hidden = w1.shape[1]
    c_out = w2.shape[1]

    # tiny wrapper-side dense ops (O(N*C)); padded to lane-dense CP=128 shapes
    xw1 = jnp.zeros((n_pad, CP), jnp.bfloat16).at[:n, :hidden].set(
        (x @ w1).astype(jnp.bfloat16))
    w2_pad = jnp.zeros((CP, CP), jnp.bfloat16).at[:hidden, :c_out].set(
        w2.astype(jnp.bfloat16))
    b1_pad = jnp.zeros((1, CP), jnp.float32).at[0, :hidden].set(b1)
    b2_pad = jnp.zeros((1, CP), jnp.float32).at[0, :c_out].set(b2)

    if n_pad <= FUSE_MAX_NPAD:
        # both layers in one pass over the VMEM-resident A_hat (A read once)
        z = fused_gcn(a_pad, xw1, w2_pad, b1_pad, b2_pad)
    else:
        # two tiled aggregation passes; tiny h@W2 stays in XLA glue
        h = aggregate(a_pad, xw1, b1_pad, apply_relu=True,
                      out_dtype=jnp.bfloat16)
        hw2 = jnp.dot(h, w2_pad,
                      preferred_element_type=jnp.float32).astype(jnp.bfloat16)
        z = aggregate(a_pad, hw2, b2_pad, apply_relu=False,
                      out_dtype=jnp.float32)

    # global_add_pool: tiny [G, N] @ [N, c_out] in XLA glue
    return pool @ z[:n, :c_out]


# ---------------------------------------------------------------------------
# Graph glue (padded dense gcn_norm adjacency, pooling matrix, test graphs)
# ---------------------------------------------------------------------------
def gcn_normalized_adjacency(edge_index, edge_weight, num_nodes, num_nodes_pad):
    """Dense padded A_hat = D^{-1/2}(A + I)D^{-1/2}, matching PyG gcn_norm with
    source_to_target flow.  Padded rows/cols are exactly zero (invariant the
    kernel padding relies on)."""
    src, dst = edge_index[0], edge_index[1]
    if edge_weight is None:
        edge_weight = jnp.ones(src.shape[0], dtype=jnp.float32)
    loop = jnp.arange(num_nodes, dtype=src.dtype)
    src = jnp.concatenate([src, loop])
    dst = jnp.concatenate([dst, loop])
    ew = jnp.concatenate([edge_weight, jnp.ones(num_nodes, jnp.float32)])
    deg = jnp.zeros(num_nodes, jnp.float32).at[dst].add(ew)
    dinv = jnp.where(deg > 0, 1.0 / jnp.sqrt(deg), 0.0)
    norm = dinv[src] * ew * dinv[dst]
    return jnp.zeros((num_nodes_pad, num_nodes_pad),
                     jnp.float32).at[dst, src].add(norm)


def make_pool_matrix(batch, num_graphs):
    return (batch[None, :] == jnp.arange(num_graphs)[:, None]).astype(jnp.float32)


def make_ring_batch(num_graphs, nodes_per_graph):
    n = num_graphs * nodes_per_graph
    idx = jnp.arange(n, dtype=jnp.int32)
    base = (idx // nodes_per_graph) * nodes_per_graph
    nxt = base + (idx - base + 1) % nodes_per_graph
    edge_index = jnp.stack([jnp.concatenate([idx, nxt]),
                            jnp.concatenate([nxt, idx])])
    batch = idx // nodes_per_graph
    return edge_index, batch


# ---------------------------------------------------------------------------
# Pure-JAX references
# ---------------------------------------------------------------------------
def reference_f32(a_hat, x, w1, b1, w2, b2, pool):
    h = jnp.maximum(a_hat @ (x @ w1) + b1, 0.0)
    z = a_hat @ (h @ w2) + b2
    return pool @ z


def reference_bf16(a_hat, x, w1, b1, w2, b2, pool):
    """Same math with the exact bf16-operand / f32-accumulation numerics the
    kernel path uses (the documented perf trade)."""
    a_bf = a_hat.astype(jnp.bfloat16)
    xw1 = (x @ w1).astype(jnp.bfloat16)
    h = jnp.maximum(
        jnp.dot(a_bf, xw1, preferred_element_type=jnp.float32) + b1, 0.0
    ).astype(jnp.bfloat16)
    hw2 = jnp.dot(h, w2.astype(jnp.bfloat16),
                  preferred_element_type=jnp.float32).astype(jnp.bfloat16)
    z = jnp.dot(a_bf, hw2, preferred_element_type=jnp.float32) + b2
    return pool @ z


if __name__ == "__main__":
    key = jax.random.PRNGKey(0)
    in_channels, hidden_channels, out_channels = 10, 5, 1

    k1, k2, k3, k4, k5 = jax.random.split(key, 5)
    w1 = jax.random.normal(k1, (in_channels, hidden_channels), jnp.float32) * 0.3
    b1 = jnp.zeros((hidden_channels,), jnp.float32)
    w2 = jax.random.normal(k2, (hidden_channels, out_channels), jnp.float32) * 0.3
    b2 = jnp.zeros((out_channels,), jnp.float32)

    cases = [
        (2, 8, k3),     # n=16,   n_pad=128  -> fused single-pass kernel
        (3, 200, k4),   # n=600,  n_pad=640  -> fused single-pass kernel
        (3, 700, k5),   # n=2100, n_pad=3072 -> tiled kernel, grid (6, 3)
    ]
    for num_graphs, nodes_per_graph, kx in cases:
        n = num_graphs * nodes_per_graph
        n_pad, _fused = _plan(n)
        x = jax.random.normal(kx, (n, in_channels), jnp.float32)
        edge_index, batch = make_ring_batch(num_graphs, nodes_per_graph)
        # A_hat built directly at padded size; cast to bf16 ONCE outside the
        # jitted forward (cached=True semantics).
        a_hat_f32 = gcn_normalized_adjacency(edge_index, None, n, n_pad)
        a_pad = a_hat_f32.astype(jnp.bfloat16)
        pool = make_pool_matrix(batch, num_graphs)

        out = gcn_forward(a_pad, x, w1, b1, w2, b2, pool)
        jax.block_until_ready(out)
        assert out.shape == (num_graphs, out_channels)

        # tight check vs a pure-JAX reference with identical bf16/f32 numerics
        ref_emu = reference_bf16(a_hat_f32[:n, :n], x, w1, b1, w2, b2, pool)
        assert jnp.allclose(out, ref_emu, atol=5e-3, rtol=5e-3), (
            float(jnp.max(jnp.abs(out - ref_emu))))

        # loose check vs original f32 math on the tiny case where the bf16
        # quantization bound is provably small.
        if n <= 64:
            ref = reference_f32(a_hat_f32[:n, :n], x, w1, b1, w2, b2, pool)
            assert jnp.allclose(out, ref, atol=5e-2, rtol=5e-2)

    print("KERNEL_OK")
</pallas_src>

<mosaic_0001>
module attributes {stable_mosaic.version = 11 : i64} {
  func.func @_fused_gcn_kernel(%arg0: memref<128x128xbf16, #tpu.memory_space<vmem>>, %arg1: memref<128x128xbf16, #tpu.memory_space<vmem>>, %arg2: memref<128x128xbf16, #tpu.memory_space<vmem>>, %arg3: memref<1x128xf32, #tpu.memory_space<vmem>>, %arg4: memref<1x128xf32, #tpu.memory_space<vmem>>, %arg5: memref<128x128xf32, #tpu.memory_space<vmem>>) attributes {dimension_semantics = [], scalar_prefetch = 0 : i64, scratch_operands = 0 : i64, tpu.core_type = #tpu.core_type<tc>} {
    %c0 = arith.constant 0 : index
    %c0_0 = arith.constant 0 : index
    %0 = vector.load %arg0[%c0, %c0_0] : memref<128x128xbf16, #tpu.memory_space<vmem>>, vector<128x128xbf16>
    %c0_1 = arith.constant 0 : index
    %c0_2 = arith.constant 0 : index
    %1 = vector.load %arg1[%c0_1, %c0_2] : memref<128x128xbf16, #tpu.memory_space<vmem>>, vector<128x128xbf16>
    %cst = arith.constant dense<0.000000e+00> : vector<128x128xf32>
    %2 = tpu.matmul %0, %1, %cst {dimension_numbers = #tpu.dot_dimension_numbers<[1], [0], [0], [1], [0, 0, 1, 1], [], []>} : vector<128x128xbf16>, vector<128x128xbf16>, vector<128x128xf32> -> vector<128x128xf32>
    %c0_3 = arith.constant 0 : index
    %c0_4 = arith.constant 0 : index
    %3 = vector.load %arg3[%c0_3, %c0_4] : memref<1x128xf32, #tpu.memory_space<vmem>>, vector<1x128xf32>
    %4 = vector.broadcast %3 : vector<1x128xf32> to vector<128x128xf32>
    %5 = arith.addf %2, %4 : vector<128x128xf32>
    %cst_5 = arith.constant 0.000000e+00 : f32
    %6 = vector.broadcast %cst_5 : f32 to vector<128x128xf32>
    %7 = arith.maximumf %5, %6 : vector<128x128xf32>
    %8 = arith.truncf %7 : vector<128x128xf32> to vector<128x128xbf16>
    %c0_6 = arith.constant 0 : index
    %c0_7 = arith.constant 0 : index
    %9 = vector.load %arg2[%c0_6, %c0_7] : memref<128x128xbf16, #tpu.memory_space<vmem>>, vector<128x128xbf16>
    %cst_8 = arith.constant dense<0.000000e+00> : vector<128x128xf32>
    %10 = tpu.matmul %8, %9, %cst_8 {dimension_numbers = #tpu.dot_dimension_numbers<[1], [0], [0], [1], [0, 0, 1, 1], [], []>} : vector<128x128xbf16>, vector<128x128xbf16>, vector<128x128xf32> -> vector<128x128xf32>
    %11 = arith.truncf %10 : vector<128x128xf32> to vector<128x128xbf16>
    %c0_9 = arith.constant 0 : index
    %c0_10 = arith.constant 0 : index
    %12 = vector.load %arg0[%c0_9, %c0_10] : memref<128x128xbf16, #tpu.memory_space<vmem>>, vector<128x128xbf16>
    %cst_11 = arith.constant dense<0.000000e+00> : vector<128x128xf32>
    %13 = tpu.matmul %12, %11, %cst_11 {dimension_numbers = #tpu.dot_dimension_numbers<[1], [0], [0], [1], [0, 0, 1, 1], [], []>} : vector<128x128xbf16>, vector<128x128xbf16>, vector<128x128xf32> -> vector<128x128xf32>
    %c0_12 = arith.constant 0 : index
    %c0_13 = arith.constant 0 : index
    %14 = vector.load %arg4[%c0_12, %c0_13] : memref<1x128xf32, #tpu.memory_space<vmem>>, vector<1x128xf32>
    %15 = vector.broadcast %14 : vector<1x128xf32> to vector<128x128xf32>
    %16 = arith.addf %13, %15 : vector<128x128xf32>
    %c0_14 = arith.constant 0 : index
    %c0_15 = arith.constant 0 : index
    %17 = vector.load %arg5[%c0_14, %c0_15] : memref<128x128xf32, #tpu.memory_space<vmem>>, vector<128x128xf32>
    tpu.vector_store %arg5[%c0_14, %c0_15], %16 {strides = array<i32>} : memref<128x128xf32, #tpu.memory_space<vmem>>, vector<128x128xf32>,
    return
  }
}

</mosaic_0001>

<llo_original>
// kernel: gcn_forward.1
$region0: #{gcn_forward.1}
  #allocation0 [shape = 'u32[]', space=smem, size = 0x4, offset = 0x4, fixed_abs, tag = 'smem constant byte address 0x4 - core index']
  #allocation1 [shape = 'u32[144,128]{1,0:T(1,128)}', space=vmem, size = 0x12000, scoped, tag = 'internal scratch']
  %s0 = inlined_call_operand.vmem [shape: bf16[128,128], index: 0, kind: input, shape index: {}]
  %s1 = inlined_call_operand.vmem [shape: bf16[128,128], index: 1, kind: input, shape index: {}]
  %s2 = inlined_call_operand.vmem [shape: bf16[128,128], index: 2, kind: input, shape index: {}]
  %s3 = inlined_call_operand.vmem [shape: f32[1,128], index: 3, kind: input, shape index: {}]
  %s4 = inlined_call_operand.vmem [shape: f32[1,128], index: 4, kind: input, shape index: {}]
  %s5 = inlined_call_operand.vmem [shape: f32[128,128], index: 5, kind: output, shape index: {}]
  %s6 = sld [smem:[#allocation0]]
  $region30: #{gcn_forward.1} parent=0
    _
  %s8 = ssub.s32 1, %s6
  %s9 = scalar_select 0, %s8, %s6
  // Predicated region
  $region2: #{gcn_forward.1} parent=0 // pred_check
    _
  $region3: #{gcn_forward.1} parent=0 // pred_check_branch
    %11 = sbr.rel (0) target = $region5
  $region4: #{gcn_forward.1} parent=0 // pred_region
    _
  $region5: #{gcn_forward.1} parent=0 // pred_fallthru
    _
  // Predicated region
  $region6: #{gcn_forward.1} parent=0 // pred_check
    _
  $region7: #{gcn_forward.1} parent=0 // pred_check_branch
    %13 = sbr.rel (0) target = $region9
  $region8: #{gcn_forward.1} parent=0 // pred_region
    _
  $region9: #{gcn_forward.1} parent=0 // pred_fallthru
    _
  // Predicated region
  $region10: #{gcn_forward.1} parent=0 // pred_check
    _
  $region11: #{gcn_forward.1} parent=0 // pred_check_branch
    %15 = sbr.rel (0) target = $region13
  $region12: #{gcn_forward.1} parent=0 // pred_region
    _
  $region13: #{gcn_forward.1} parent=0 // pred_fallthru
    _
  // Predicated region
  $region14: #{gcn_forward.1} parent=0 // pred_check
    _
  $region15: #{gcn_forward.1} parent=0 // pred_check_branch
    %17 = sbr.rel (0) target = $region17
  $region16: #{gcn_forward.1} parent=0 // pred_region
    _
  $region17: #{gcn_forward.1} parent=0 // pred_fallthru
    _
  // Predicated region
  $region18: #{gcn_forward.1} parent=0 // pred_check
    _
  $region19: #{gcn_forward.1} parent=0 // pred_check_branch
    %19 = sbr.rel (0) target = $region21
  $region20: #{gcn_forward.1} parent=0 // pred_region
    _
  $region21: #{gcn_forward.1} parent=0 // pred_fallthru
    _
  %v21 = vld [vmem:[%s0] sm:$0xf]
  %v22 = vld [vmem:[%s0 + $0x4] sm:$0xf]
  %v23 = vld [vmem:[%s0 + $0x8] sm:$0xf]
  %v24 = vld [vmem:[%s0 + $0xc] sm:$0xf]
  %v25 = vld [vmem:[%s0 + $0x10] sm:$0xf]
  %v26 = vld [vmem:[%s0 + $0x14] sm:$0xf]
  %v27 = vld [vmem:[%s0 + $0x18] sm:$0xf]
  %v28 = vld [vmem:[%s0 + $0x1c] sm:$0xf]
  %v29 = vld [vmem:[%s0 + $0x20] sm:$0xf]
  %v30 = vld [vmem:[%s0 + $0x24] sm:$0xf]
  %v31 = vld [vmem:[%s0 + $0x28] sm:$0xf]
  %v32 = vld [vmem:[%s0 + $0x2c] sm:$0xf]
  %v33 = vld [vmem:[%s0 + $0x30] sm:$0xf]
  %v34 = vld [vmem:[%s0 + $0x34] sm:$0xf]
  %v35 = vld [vmem:[%s0 + $0x38] sm:$0xf]
  %v36 = vld [vmem:[%s0 + $0x3c] sm:$0xf]
  %v37 = vld [vmem:[%s1] sm:$0xf]
  %v38 = vld [vmem:[%s1 + $0x4] sm:$0xf]
  %v39 = vld [vmem:[%s1 + $0x8] sm:$0xf]
  %v40 = vld [vmem:[%s1 + $0xc] sm:$0xf]
  %v41 = vld [vmem:[%s1 + $0x10] sm:$0xf]
  %v42 = vld [vmem:[%s1 + $0x14] sm:$0xf]
  %v43 = vld [vmem:[%s1 + $0x18] sm:$0xf]
  %v44 = vld [vmem:[%s1 + $0x1c] sm:$0xf]
  %v45 = vld [vmem:[%s1 + $0x20] sm:$0xf]
  %v46 = vld [vmem:[%s1 + $0x24] sm:$0xf]
  %v47 = vld [vmem:[%s1 + $0x28] sm:$0xf]
  %v48 = vld [vmem:[%s1 + $0x2c] sm:$0xf]
  %v49 = vld [vmem:[%s1 + $0x30] sm:$0xf]
  %v50 = vld [vmem:[%s1 + $0x34] sm:$0xf]
  %v51 = vld [vmem:[%s1 + $0x38] sm:$0xf]
  %v52 = vld [vmem:[%s1 + $0x3c] sm:$0xf]
  %v53 = vld [vmem:[%s3] sm:$0x1]
  %v55 = vlaneseq
  %v56 = vshrl.u32 %v55, 7
  %v57 = vsub.s32 0, %v56
  %v58 = vrot.slane %v53, %v57
  %v76 = vunpack.c.l.b16 %v21
  %v77 = vunpack.c.l.b16 %v22
  %v78 = vunpack.c.l.b16 %v23
  %v79 = vunpack.c.l.b16 %v24
  %v80 = vunpack.c.l.b16 %v25
  %v81 = vunpack.c.l.b16 %v26
  %v82 = vunpack.c.l.b16 %v27
  %v83 = vunpack.c.l.b16 %v28
  %v84 = vunpack.c.l.b16 %v29
  %v85 = vunpack.c.l.b16 %v30
  %v86 = vunpack.c.l.b16 %v31
  %v87 = vunpack.c.l.b16 %v32
  %v88 = vunpack.c.l.b16 %v33
  %v89 = vunpack.c.l.b16 %v34
  %v90 = vunpack.c.l.b16 %v35
  %v91 = vunpack.c.l.b16 %v36
  %v92 = vpack.c.b16 %v77, %v76
  %v93 = vpack.c.b16 %v79, %v78
  %v94 = vpack.c.b16 %v81, %v80
  %v95 = vpack.c.b16 %v83, %v82
  %v96 = vpack.c.b16 %v85, %v84
  %v97 = vpack.c.b16 %v87, %v86
  %v98 = vpack.c.b16 %v89, %v88
  %v99 = vpack.c.b16 %v91, %v90
  %v124 = vunpack.c.l.b16 %v37
  %v125 = vunpack.c.l.b16 %v38
  %v126 = vunpack.c.l.b16 %v39
  %v127 = vunpack.c.l.b16 %v40
  %v128 = vunpack.c.l.b16 %v41
  %v129 = vunpack.c.l.b16 %v42
  %v130 = vunpack.c.l.b16 %v43
  %v131 = vunpack.c.l.b16 %v44
  %v132 = vunpack.c.l.b16 %v45
  %v133 = vunpack.c.l.b16 %v46
  %v134 = vunpack.c.l.b16 %v47
  %v135 = vunpack.c.l.b16 %v48
  %v136 = vunpack.c.l.b16 %v49
  %v137 = vunpack.c.l.b16 %v50
  %v138 = vunpack.c.l.b16 %v51
  %v139 = vunpack.c.l.b16 %v52
  %v140 = vpack.c.b16 %v125, %v124
  %v141 = vpack.c.b16 %v127, %v126
  %v142 = vpack.c.b16 %v129, %v128
  %v143 = vpack.c.b16 %v131, %v130
  %v144 = vpack.c.b16 %v133, %v132
  %v145 = vpack.c.b16 %v135, %v134
  %v146 = vpack.c.b16 %v137, %v136
  %v147 = vpack.c.b16 %v139, %v138
  %156 = vmatprep.subr.bf16.mxu0 0
  %157 = vmatpush1.bf16.msra.mxu0 %v140
  %158 = vmatprep.subr.bf16.mxu0 0
  %159 = vmatpush1.bf16.msra.mxu0 %v141
  %160 = vmatprep.subr.bf16.mxu0 0
  %161 = vmatpush1.bf16.msra.mxu0 %v142
  %162 = vmatprep.subr.bf16.mxu0 0
  %163 = vmatpush1.bf16.msra.mxu0 %v143
  %164 = vmatprep.subr.bf16.mxu0 0
  %165 = vmatpush1.bf16.msra.mxu0 %v144
  %166 = vmatprep.subr.bf16.mxu0 0
  %167 = vmatpush1.bf16.msra.mxu0 %v145
  %168 = vmatprep.subr.bf16.mxu0 0
  %169 = vmatpush1.bf16.msra.mxu0 %v146
  %170 = vmatprep.subr.bf16.mxu0 0
  %171 = vmatpush1.bf16.msra.mxu0 %v147
  %172 = vmatprep.subr.bf16.mxu0 0
  %173 = vmatpush1.bf16.msra.mxu0 0
  %174 = vmatprep.subr.bf16.mxu0 0
  %175 = vmatpush1.bf16.msra.mxu0 0
  %176 = vmatprep.subr.bf16.mxu0 0
  %177 = vmatpush1.bf16.msra.mxu0 0
  %178 = vmatprep.subr.bf16.mxu0 0
  %179 = vmatpush1.bf16.msra.mxu0 0
  %180 = vmatprep.subr.bf16.mxu0 0
  %181 = vmatpush1.bf16.msra.mxu0 0
  %182 = vmatprep.subr.bf16.mxu0 0
  %183 = vmatpush1.bf16.msra.mxu0 0
  %184 = vmatprep.subr.bf16.mxu0 0
  %185 = vmatpush1.bf16.msra.mxu0 0
  %186 = vmatprep.subr.bf16.mxu0 0
  %187 = vmatpush1.bf16.msra.mxu0 0
  %188 = vmatprep.mubr.bf16.mxu0 0
  %189 = vmatmul.mubr.bf16.gmra.mrb[0].mxu0 %v92
  %v190 = vpop.f32.mrb[0].mxu0
  %v191 = vadd.f32 %v58, %v190
  %v192 = vpop.f32.mrb[0].mxu0
  %v193 = vpop.f32.mrb[0].mxu0
  %v194 = vadd.f32 %v58, %v193
  %v195 = vpop.f32.mrb[0].mxu0
  %196 = vmatprep.mubr.bf16.mxu0 0
  %197 = vmatmul.mubr.bf16.gmra.mrb[0].mxu0 %v93
  %v198 = vpop.f32.mrb[0].mxu0
  %v199 = vadd.f32 %v58, %v198
  %v200 = vpop.f32.mrb[0].mxu0
  %v201 = vpop.f32.mrb[0].mxu0
  %v202 = vadd.f32 %v58, %v201
  %v203 = vpop.f32.mrb[0].mxu0
  %204 = vmatprep.mubr.bf16.mxu0 0
  %205 = vmatmul.mubr.bf16.gmra.mrb[0].mxu0 %v94
  %v206 = vpop.f32.mrb[0].mxu0
  %v207 = vadd.f32 %v58, %v206
  %v208 = vpop.f32.mrb[0].mxu0
  %v209 = vpop.f32.mrb[0].mxu0
  %v210 = vadd.f32 %v58, %v209
  %v211 = vpop.f32.mrb[0].mxu0
  %212 = vmatprep.mubr.bf16.mxu0 0
  %213 = vmatmul.mubr.bf16.gmra.mrb[0].mxu0 %v95
  %v214 = vpop.f32.mrb[0].mxu0
  %v215 = vadd.f32 %v58, %v214
  %v216 = vpop.f32.mrb[0].mxu0
  %v217 = vpop.f32.mrb[0].mxu0
  %v218 = vadd.f32 %v58, %v217
  %v219 = vpop.f32.mrb[0].mxu0
  %220 = vmatprep.mubr.bf16.mxu0 0
  %221 = vmatmul.mubr.bf16.gmra.mrb[0].mxu0 %v96
  %v222 = vpop.f32.mrb[0].mxu0
  %v223 = vadd.f32 %v58, %v222
  %v224 = vpop.f32.mrb[0].mxu0
  %v225 = vpop.f32.mrb[0].mxu0
  %v226 = vadd.f32 %v58, %v225
  %v227 = vpop.f32.mrb[0].mxu0
  %228 = vmatprep.mubr.bf16.mxu0 0
  %229 = vmatmul.mubr.bf16.gmra.mrb[0].mxu0 %v97
  %v230 = vpop.f32.mrb[0].mxu0
  %v231 = vadd.f32 %v58, %v230
  %v232 = vpop.f32.mrb[0].mxu0
  %v233 = vpop.f32.mrb[0].mxu0
  %v234 = vadd.f32 %v58, %v233
  %v235 = vpop.f32.mrb[0].mxu0
  %236 = vmatprep.mubr.bf16.mxu0 0
  %237 = vmatmul.mubr.bf16.gmra.mrb[0].mxu0 %v98
  %v238 = vpop.f32.mrb[0].mxu0
  %v239 = vadd.f32 %v58, %v238
  %v240 = vpop.f32.mrb[0].mxu0
  %v241 = vpop.f32.mrb[0].mxu0
  %v242 = vadd.f32 %v58, %v241
  %v243 = vpop.f32.mrb[0].mxu0
  %244 = vmatprep.mubr.bf16.mxu0 0
  %245 = vmatmul.mubr.bf16.gmra.mrb[0].mxu0 %v99
  %v246 = vpop.f32.mrb[0].mxu0
  %v247 = vadd.f32 %v58, %v246
  %v248 = vpop.f32.mrb[0].mxu0
  %v249 = vpop.f32.mrb[0].mxu0
  %v250 = vadd.f32 %v58, %v249
  %v251 = vpop.f32.mrb[0].mxu0
  %252 = vdwg.mxu0
  %v253 = vmax.f32 %v191, 0.0
  %v254 = vmax.f32 %v194, 0.0
  %v255 = vmax.f32 %v199, 0.0
  %v256 = vmax.f32 %v202, 0.0
  %v257 = vmax.f32 %v207, 0.0
  %v258 = vmax.f32 %v210, 0.0
  %v259 = vmax.f32 %v215, 0.0
  %v260 = vmax.f32 %v218, 0.0
  %v261 = vmax.f32 %v223, 0.0
  %v262 = vmax.f32 %v226, 0.0
  %v263 = vmax.f32 %v231, 0.0
  %v264 = vmax.f32 %v234, 0.0
  %v265 = vmax.f32 %v239, 0.0
  %v266 = vmax.f32 %v242, 0.0
  %v267 = vmax.f32 %v247, 0.0
  %v268 = vmax.f32 %v250, 0.0
  %v269 = vpack.c.bf16 %v254, %v253
  %v270 = vpack.c.bf16 %v256, %v255
  %v271 = vpack.c.bf16 %v258, %v257
  %v272 = vpack.c.bf16 %v260, %v259
  %v273 = vpack.c.bf16 %v262, %v261
  %v274 = vpack.c.bf16 %v264, %v263
  %v275 = vpack.c.bf16 %v266, %v265
  %v276 = vpack.c.bf16 %v268, %v267
  %v277 = vld [vmem:[%s2] sm:$0xf]
  %v278 = vld [vmem:[%s2 + $0x4] sm:$0xf]
  %v279 = vld [vmem:[%s2 + $0x8] sm:$0xf]
  %v280 = vld [vmem:[%s2 + $0xc] sm:$0xf]
  %v281 = vld [vmem:[%s2 + $0x10] sm:$0xf]
  %v282 = vld [vmem:[%s2 + $0x14] sm:$0xf]
  %v283 = vld [vmem:[%s2 + $0x18] sm:$0xf]
  %v284 = vld [vmem:[%s2 + $0x1c] sm:$0xf]
  %v285 = vld [vmem:[%s2 + $0x20] sm:$0xf]
  %v286 = vld [vmem:[%s2 + $0x24] sm:$0xf]
  %v287 = vld [vmem:[%s2 + $0x28] sm:$0xf]
  %v288 = vld [vmem:[%s2 + $0x2c] sm:$0xf]
  %v289 = vld [vmem:[%s2 + $0x30] sm:$0xf]
  %v290 = vld [vmem:[%s2 + $0x34] sm:$0xf]
  %v291 = vld [vmem:[%s2 + $0x38] sm:$0xf]
  %v292 = vld [vmem:[%s2 + $0x3c] sm:$0xf]
  %v309 = vunpack.c.l.b16 %v277
  %v310 = vunpack.c.l.b16 %v278
  %v311 = vunpack.c.l.b16 %v279
  %v312 = vunpack.c.l.b16 %v280
  %v313 = vunpack.c.l.b16 %v281
  %v314 = vunpack.c.l.b16 %v282
  %v315 = vunpack.c.l.b16 %v283
  %v316 = vunpack.c.l.b16 %v284
  %v317 = vunpack.c.l.b16 %v285
  %v318 = vunpack.c.l.b16 %v286
  %v319 = vunpack.c.l.b16 %v287
  %v320 = vunpack.c.l.b16 %v288
  %v321 = vunpack.c.l.b16 %v289
  %v322 = vunpack.c.l.b16 %v290
  %v323 = vunpack.c.l.b16 %v291
  %v324 = vunpack.c.l.b16 %v292
  %v325 = vpack.c.b16 %v310, %v309
  %v326 = vpack.c.b16 %v312, %v311
  %v327 = vpack.c.b16 %v314, %v313
  %v328 = vpack.c.b16 %v316, %v315
  %v329 = vpack.c.b16 %v318, %v317
  %v330 = vpack.c.b16 %v320, %v319
  %v331 = vpack.c.b16 %v322, %v321
  %v332 = vpack.c.b16 %v324, %v323
  %341 = vmatprep.subr.bf16.mxu0 0
  %342 = vmatpush1.bf16.msra.mxu0 %v325
  %343 = vmatprep.subr.bf16.mxu0 0
  %344 = vmatpush1.bf16.msra.mxu0 %v326
  %345 = vmatprep.subr.bf16.mxu0 0
  %346 = vmatpush1.bf16.msra.mxu0 %v327
  %347 = vmatprep.subr.bf16.mxu0 0
  %348 = vmatpush1.bf16.msra.mxu0 %v328
  %349 = vmatprep.subr.bf16.mxu0 0
  %350 = vmatpush1.bf16.msra.mxu0 %v329
  %351 = vmatprep.subr.bf16.mxu0 0
  %352 = vmatpush1.bf16.msra.mxu0 %v330
  %353 = vmatprep.subr.bf16.mxu0 0
  %354 = vmatpush1.bf16.msra.mxu0 %v331
  %355 = vmatprep.subr.bf16.mxu0 0
  %356 = vmatpush1.bf16.msra.mxu0 %v332
  %357 = vmatprep.subr.bf16.mxu0 0
  %358 = vmatpush1.bf16.msra.mxu0 0
  %359 = vmatprep.subr.bf16.mxu0 0
  %360 = vmatpush1.bf16.msra.mxu0 0
  %361 = vmatprep.subr.bf16.mxu0 0
  %362 = vmatpush1.bf16.msra.mxu0 0
  %363 = vmatprep.subr.bf16.mxu0 0
  %364 = vmatpush1.bf16.msra.mxu0 0
  %365 = vmatprep.subr.bf16.mxu0 0
  %366 = vmatpush1.bf16.msra.mxu0 0
  %367 = vmatprep.subr.bf16.mxu0 0
  %368 = vmatpush1.bf16.msra.mxu0 0
  %369 = vmatprep.subr.bf16.mxu0 0
  %370 = vmatpush1.bf16.msra.mxu0 0
  %371 = vmatprep.subr.bf16.mxu0 0
  %372 = vmatpush1.bf16.msra.mxu0 0
  %373 = vmatprep.mubr.bf16.mxu0 0
  %374 = vmatmul.mubr.bf16.gmra.mrb[0].mxu0 %v269
  %v375 = vpop.f32.mrb[0].mxu0
  %v376 = vadd.f32 0.0, %v375
  %v377 = vpop.f32.mrb[0].mxu0
  %v378 = vpop.f32.mrb[0].mxu0
  %v379 = vadd.f32 0.0, %v378
  %v380 = vpop.f32.mrb[0].mxu0
  %381 = vmatprep.mubr.bf16.mxu0 0
  %382 = vmatmul.mubr.bf16.gmra.mrb[0].mxu0 %v270
  %v383 = vpop.f32.mrb[0].mxu0
  %v384 = vadd.f32 0.0, %v383
  %v385 = vpop.f32.mrb[0].mxu0
  %v386 = vpop.f32.mrb[0].mxu0
  %v387 = vadd.f32 0.0, %v386
  %v388 = vpop.f32.mrb[0].mxu0
  %389 = vmatprep.mubr.bf16.mxu0 0
  %390 = vmatmul.mubr.bf16.gmra.mrb[0].mxu0 %v271
  %v391 = vpop.f32.mrb[0].mxu0
  %v392 = vadd.f32 0.0, %v391
  %v393 = vpop.f32.mrb[0].mxu0
  %v394 = vpop.f32.mrb[0].mxu0
  %v395 = vadd.f32 0.0, %v394
  %v396 = vpop.f32.mrb[0].mxu0
  %397 = vmatprep.mubr.bf16.mxu0 0
  %398 = vmatmul.mubr.bf16.gmra.mrb[0].mxu0 %v272
  %v399 = vpop.f32.mrb[0].mxu0
  %v400 = vadd.f32 0.0, %v399
  %v401 = vpop.f32.mrb[0].mxu0
  %v402 = vpop.f32.mrb[0].mxu0
  %v403 = vadd.f32 0.0, %v402
  %v404 = vpop.f32.mrb[0].mxu0
  %405 = vmatprep.mubr.bf16.mxu0 0
  %406 = vmatmul.mubr.bf16.gmra.mrb[0].mxu0 %v273
  %v407 = vpop.f32.mrb[0].mxu0
  %v408 = vadd.f32 0.0, %v407
  %v409 = vpop.f32.mrb[0].mxu0
  %v410 = vpop.f32.mrb[0].mxu0
  %v411 = vadd.f32 0.0, %v410
  %v412 = vpop.f32.mrb[0].mxu0
  %413 = vmatprep.mubr.bf16.mxu0 0
  %414 = vmatmul.mubr.bf16.gmra.mrb[0].mxu0 %v274
  %v415 = vpop.f32.mrb[0].mxu0
  %v416 = vadd.f32 0.0, %v415
  %v417 = vpop.f32.mrb[0].mxu0
  %v418 = vpop.f32.mrb[0].mxu0
  %v419 = vadd.f32 0.0, %v418
  %v420 = vpop.f32.mrb[0].mxu0
  %421 = vmatprep.mubr.bf16.mxu0 0
  %422 = vmatmul.mubr.bf16.gmra.mrb[0].mxu0 %v275
  %v423 = vpop.f32.mrb[0].mxu0
  %v424 = vadd.f32 0.0, %v423
  %v425 = vpop.f32.mrb[0].mxu0
  %v426 = vpop.f32.mrb[0].mxu0
  %v427 = vadd.f32 0.0, %v426
  %v428 = vpop.f32.mrb[0].mxu0
  %429 = vmatprep.mubr.bf16.mxu0 0
  %430 = vmatmul.mubr.bf16.gmra.mrb[0].mxu0 %v276
  %v431 = vpop.f32.mrb[0].mxu0
  %v432 = vadd.f32 0.0, %v431
  %v433 = vpop.f32.mrb[0].mxu0
  %v434 = vpop.f32.mrb[0].mxu0
  %v435 = vadd.f32 0.0, %v434
  %v436 = vpop.f32.mrb[0].mxu0
  %437 = vdwg.mxu0
  %v438 = vpack.c.bf16 %v379, %v376
  %v439 = vpack.c.bf16 %v387, %v384
  %v440 = vpack.c.bf16 %v395, %v392
  %v441 = vpack.c.bf16 %v403, %v400
  %v442 = vpack.c.bf16 %v411, %v408
  %v443 = vpack.c.bf16 %v419, %v416
  %v444 = vpack.c.bf16 %v427, %v424
  %v445 = vpack.c.bf16 %v435, %v432
  %v446 = vld [vmem:[%s4] sm:$0x1]
  %v448 = vlaneseq
  %v449 = vshrl.u32 %v448, 7
  %v450 = vsub.s32 0, %v449
  %v451 = vrot.slane %v446, %v450
  %453 = vmatprep.subr.bf16.mxu0 0
  %454 = vmatpush1.bf16.msra.mxu0 %v438
  %455 = vmatprep.subr.bf16.mxu0 0
  %456 = vmatpush1.bf16.msra.mxu0 %v439
  %457 = vmatprep.subr.bf16.mxu0 0
  %458 = vmatpush1.bf16.msra.mxu0 %v440
  %459 = vmatprep.subr.bf16.mxu0 0
  %460 = vmatpush1.bf16.msra.mxu0 %v441
  %461 = vmatprep.subr.bf16.mxu0 0
  %462 = vmatpush1.bf16.msra.mxu0 %v442
  %463 = vmatprep.subr.bf16.mxu0 0
  %464 = vmatpush1.bf16.msra.mxu0 %v443
  %465 = vmatprep.subr.bf16.mxu0 0
  %466 = vmatpush1.bf16.msra.mxu0 %v444
  %467 = vmatprep.subr.bf16.mxu0 0
  %468 = vmatpush1.bf16.msra.mxu0 %v445
  %469 = vmatprep.subr.bf16.mxu0 0
  %470 = vmatpush1.bf16.msra.mxu0 0
  %471 = vmatprep.subr.bf16.mxu0 0
  %472 = vmatpush1.bf16.msra.mxu0 0
  %473 = vmatprep.subr.bf16.mxu0 0
  %474 = vmatpush1.bf16.msra.mxu0 0
  %475 = vmatprep.subr.bf16.mxu0 0
  %476 = vmatpush1.bf16.msra.mxu0 0
  %477 = vmatprep.subr.bf16.mxu0 0
  %478 = vmatpush1.bf16.msra.mxu0 0
  %479 = vmatprep.subr.bf16.mxu0 0
  %480 = vmatpush1.bf16.msra.mxu0 0
  %481 = vmatprep.subr.bf16.mxu0 0
  %482 = vmatpush1.bf16.msra.mxu0 0
  %483 = vmatprep.subr.bf16.mxu0 0
  %484 = vmatpush1.bf16.msra.mxu0 0
  %485 = vmatprep.mubr.bf16.mxu0 0
  %486 = vmatmul.mubr.bf16.gmra.mrb[0].mxu0 %v92
  %v487 = vpop.f32.mrb[0].mxu0
  %v488 = vadd.f32 %v451, %v487
  %v489 = vpop.f32.mrb[0].mxu0
  %v490 = vpop.f32.mrb[0].mxu0
  %v491 = vadd.f32 %v451, %v490
  %v492 = vpop.f32.mrb[0].mxu0
  %493 = vmatprep.mubr.bf16.mxu0 0
  %494 = vmatmul.mubr.bf16.gmra.mrb[0].mxu0 %v93
  %v495 = vpop.f32.mrb[0].mxu0
  %v496 = vadd.f32 %v451, %v495
  %v497 = vpop.f32.mrb[0].mxu0
  %v498 = vpop.f32.mrb[0].mxu0
  %v499 = vadd.f32 %v451, %v498
  %v500 = vpop.f32.mrb[0].mxu0
  %501 = vmatprep.mubr.bf16.mxu0 0
  %502 = vmatmul.mubr.bf16.gmra.mrb[0].mxu0 %v94
  %v503 = vpop.f32.mrb[0].mxu0
  %v504 = vadd.f32 %v451, %v503
  %v505 = vpop.f32.mrb[0].mxu0
  %v506 = vpop.f32.mrb[0].mxu0
  %v507 = vadd.f32 %v451, %v506
  %v508 = vpop.f32.mrb[0].mxu0
  %509 = vmatprep.mubr.bf16.mxu0 0
  %510 = vmatmul.mubr.bf16.gmra.mrb[0].mxu0 %v95
  %v511 = vpop.f32.mrb[0].mxu0
  %v512 = vadd.f32 %v451, %v511
  %v513 = vpop.f32.mrb[0].mxu0
  %v514 = vpop.f32.mrb[0].mxu0
  %v515 = vadd.f32 %v451, %v514
  %v516 = vpop.f32.mrb[0].mxu0
  %517 = vmatprep.mubr.bf16.mxu0 0
  %518 = vmatmul.mubr.bf16.gmra.mrb[0].mxu0 %v96
  %v519 = vpop.f32.mrb[0].mxu0
  %v520 = vadd.f32 %v451, %v519
  %v521 = vpop.f32.mrb[0].mxu0
  %v522 = vpop.f32.mrb[0].mxu0
  %v523 = vadd.f32 %v451, %v522
  %v524 = vpop.f32.mrb[0].mxu0
  %525 = vmatprep.mubr.bf16.mxu0 0
  %526 = vmatmul.mubr.bf16.gmra.mrb[0].mxu0 %v97
  %v527 = vpop.f32.mrb[0].mxu0
  %v528 = vadd.f32 %v451, %v527
  %v529 = vpop.f32.mrb[0].mxu0
  %v530 = vpop.f32.mrb[0].mxu0
  %v531 = vadd.f32 %v451, %v530
  %v532 = vpop.f32.mrb[0].mxu0
  %533 = vmatprep.mubr.bf16.mxu0 0
  %534 = vmatmul.mubr.bf16.gmra.mrb[0].mxu0 %v98
  %v535 = vpop.f32.mrb[0].mxu0
  %v536 = vadd.f32 %v451, %v535
  %v537 = vpop.f32.mrb[0].mxu0
  %v538 = vpop.f32.mrb[0].mxu0
  %v539 = vadd.f32 %v451, %v538
  %v540 = vpop.f32.mrb[0].mxu0
  %541 = vmatprep.mubr.bf16.mxu0 0
  %542 = vmatmul.mubr.bf16.gmra.mrb[0].mxu0 %v99
  %v543 = vpop.f32.mrb[0].mxu0
  %v544 = vadd.f32 %v451, %v543
  %v545 = vpop.f32.mrb[0].mxu0
  %v546 = vpop.f32.mrb[0].mxu0
  %v547 = vadd.f32 %v451, %v546
  %v548 = vpop.f32.mrb[0].mxu0
  %549 = vdwg.mxu0
  %550 = vst [vmem:[%s5] sm:$0xff] %v488
  %551 = vst [vmem:[%s5 + $0x8] sm:$0xff] %v491
  %552 = vst [vmem:[%s5 + $0x10] sm:$0xff] %v496
  %553 = vst [vmem:[%s5 + $0x18] sm:$0xff] %v499
  %554 = vst [vmem:[%s5 + $0x20] sm:$0xff] %v504
  %555 = vst [vmem:[%s5 + $0x28] sm:$0xff] %v507
  %556 = vst [vmem:[%s5 + $0x30] sm:$0xff] %v512
  %557 = vst [vmem:[%s5 + $0x38] sm:$0xff] %v515
  %558 = vst [vmem:[%s5 + $0x40] sm:$0xff] %v520
  %559 = vst [vmem:[%s5 + $0x48] sm:$0xff] %v523
  %560 = vst [vmem:[%s5 + $0x50] sm:$0xff] %v528
  %561 = vst [vmem:[%s5 + $0x58] sm:$0xff] %v531
  %562 = vst [vmem:[%s5 + $0x60] sm:$0xff] %v536
  %563 = vst [vmem:[%s5 + $0x68] sm:$0xff] %v539
  %564 = vst [vmem:[%s5 + $0x70] sm:$0xff] %v544
  %565 = vst [vmem:[%s5 + $0x78] sm:$0xff] %v547
  // Predicated region
  $region22: #{gcn_forward.1} parent=0 // pred_check
    _
  $region23: #{gcn_forward.1} parent=0 // pred_check_branch
    %567 = sbr.rel (0) target = $region25
  $region24: #{gcn_forward.1} parent=0 // pred_region
    _
  $region25: #{gcn_forward.1} parent=0 // pred_fallthru
    _
  // Predicated region
  $region26: #{gcn_forward.1} parent=0 // pred_check
    _
  $region27: #{gcn_forward.1} parent=0 // pred_check_branch
    %569 = sbr.rel (0) target = $region29
  $region28: #{gcn_forward.1} parent=0 // pred_region
    _
  $region29: #{gcn_forward.1} parent=0 // pred_fallthru
    _

</llo_original>
